<compile_context>
chip_gen: v6e
topology: v6e:2x2x1
jax: 0.10.0
libtpu: 0.0.40
codegen_flags: <defaults>
</compile_context>

<pallas_src>
import jax
import jax.numpy as jnp
from jax.experimental import pallas as pl
from jax.experimental.pallas import tpu as pltpu

IN_DIM = 28 * 28     # 784
IN_PAD = 896         # 7 * 128, lane-dense contraction dim for fc1
HIDDEN_1 = 256
HIDDEN_2 = 128
OUT_DIM = 10
OUT_PAD = 128        # lane-dense padded logits width (multiple of 128)


def _round_up(a, b):
    return (a + b - 1) // b * b


def _default_tm():
    """Batch tile: 256 on v5e (4x128x128 MXU), 512 on v6e/v7x (2x256x256 MXU)."""
    try:
        kind = jax.devices()[0].device_kind.lower()
        if "v5 lite" in kind or "v5e" in kind or "v5lite" in kind:
            return 256
    except Exception:
        pass
    return 512


def _mlp_kernel(x_ref, w1_ref, b1_ref, w2_ref, b2_ref, w3_ref, b3_ref, o_ref):
    """Fused 3-layer MLP forward for one (TM, 896) batch tile.

    x_ref : (TM, 896)  bf16 (cols 784..895 zero)
    w1_ref: (896, 256) bf16 (rows 784..895 zero), b1_ref: (1, 256) f32
    w2_ref: (256, 128) bf16,                      b2_ref: (1, 128) f32
    w3_ref: (128, 128) bf16 (cols 10..127 zero),  b3_ref: (1, 128) f32
    o_ref : (TM, 128)  f32  (cols 10..127 are zero-ish padding, sliced off)
    """
    x = x_ref[...]

    # fc1 + ReLU (bf16 MXU matmul, f32 accumulation)
    h1 = jnp.dot(x, w1_ref[...], preferred_element_type=jnp.float32) + b1_ref[...]
    h1 = jnp.maximum(h1, 0.0)
    # dropout(p=0.2): identity in inference mode

    # fc2 + ReLU
    h2 = jnp.dot(h1.astype(jnp.bfloat16), w2_ref[...],
                 preferred_element_type=jnp.float32) + b2_ref[...]
    h2 = jnp.maximum(h2, 0.0)
    # dropout(p=0.2): identity in inference mode

    # fc3 (padded logits, no activation) -- lane-dense 128-wide store
    o_ref[...] = jnp.dot(h2.astype(jnp.bfloat16), w3_ref[...],
                         preferred_element_type=jnp.float32) + b3_ref[...]


def net_forward(x_nchw, params, tm=None):
    """Forward pass. x_nchw: (B, 1, 28, 28) float32 -> (B, 10) float32."""
    w1, b1, w2, b2, w3, b3 = params
    B = x_nchw.shape[0]
    x = x_nchw.reshape(B, IN_DIM)          # x.view(-1, 28*28)

    if tm is None:
        tm = _default_tm()
    tm = min(tm, _round_up(max(B, 1), 8))  # small-batch fallback
    Bp = _round_up(B, tm)

    # Pad batch to a tile multiple and the feature dim to 896 (lane-dense),
    # then cast activations to bf16 for the MXU.
    x = jnp.pad(x, ((0, Bp - B), (0, IN_PAD - IN_DIM))).astype(jnp.bfloat16)

    # bf16 weights for the MXU; biases stay f32 (added to the f32 accumulator).
    w1p = jnp.zeros((IN_PAD, HIDDEN_1), jnp.bfloat16).at[:IN_DIM, :].set(
        w1.astype(jnp.bfloat16))
    w2b = w2.astype(jnp.bfloat16)
    w3p = jnp.zeros((HIDDEN_2, OUT_PAD), jnp.bfloat16).at[:, :OUT_DIM].set(
        w3.astype(jnp.bfloat16))
    b1f = b1.astype(jnp.float32).reshape(1, HIDDEN_1)
    b2f = b2.astype(jnp.float32).reshape(1, HIDDEN_2)
    b3p = jnp.zeros((1, OUT_PAD), jnp.float32).at[:, :OUT_DIM].set(
        b3.astype(jnp.float32).reshape(1, OUT_DIM))

    grid = (Bp // tm,)
    flops = 2 * Bp * (IN_PAD * HIDDEN_1 + HIDDEN_1 * HIDDEN_2 + HIDDEN_2 * OUT_PAD)
    bytes_accessed = (
        Bp * IN_PAD * 2                                   # x stream (bf16)
        + Bp * OUT_PAD * 4                                # padded logits (f32)
        + (IN_PAD * HIDDEN_1 + HIDDEN_1 * HIDDEN_2 + HIDDEN_2 * OUT_PAD) * 2
        + (HIDDEN_1 + HIDDEN_2 + OUT_PAD) * 4)            # weights + biases

    out_padded = pl.pallas_call(
        _mlp_kernel,
        out_shape=jax.ShapeDtypeStruct((Bp, OUT_PAD), jnp.float32),
        grid=grid,
        in_specs=[
            pl.BlockSpec((tm, IN_PAD), lambda i: (i, 0)),          # x tile
            pl.BlockSpec((IN_PAD, HIDDEN_1), lambda i: (0, 0)),    # w1 (resident)
            pl.BlockSpec((1, HIDDEN_1), lambda i: (0, 0)),         # b1
            pl.BlockSpec((HIDDEN_1, HIDDEN_2), lambda i: (0, 0)),  # w2
            pl.BlockSpec((1, HIDDEN_2), lambda i: (0, 0)),         # b2
            pl.BlockSpec((HIDDEN_2, OUT_PAD), lambda i: (0, 0)),   # w3 (padded)
            pl.BlockSpec((1, OUT_PAD), lambda i: (0, 0)),          # b3 (padded)
        ],
        out_specs=pl.BlockSpec((tm, OUT_PAD), lambda i: (i, 0)),
        compiler_params=pltpu.CompilerParams(
            dimension_semantics=("parallel",)),
        cost_estimate=pl.CostEstimate(
            flops=flops, transcendentals=0, bytes_accessed=bytes_accessed),
    )(x, w1p, b1f, w2b, b2f, w3p, b3p)

    return out_padded[:B, :OUT_DIM]


def init_params(key, constant_weight=None):
    """Parameter init matching nn.Linear shapes (weights stored (in, out)).

    If constant_weight is given, mimics nn.init.constant_(weight, c) / bias=0.
    Otherwise uses PyTorch's default Linear init: U(-1/sqrt(fan_in), 1/sqrt(fan_in)).
    """
    shapes = [(IN_DIM, HIDDEN_1), (HIDDEN_1, HIDDEN_2), (HIDDEN_2, OUT_DIM)]
    params = []
    keys = jax.random.split(key, 2 * len(shapes))
    for i, (fan_in, fan_out) in enumerate(shapes):
        if constant_weight is not None:
            w = jnp.full((fan_in, fan_out), constant_weight, dtype=jnp.float32)
            b = jnp.zeros((1, fan_out), dtype=jnp.float32)
        else:
            bound = 1.0 / (fan_in ** 0.5)
            w = jax.random.uniform(keys[2 * i], (fan_in, fan_out),
                                   minval=-bound, maxval=bound, dtype=jnp.float32)
            b = jax.random.uniform(keys[2 * i + 1], (1, fan_out),
                                   minval=-bound, maxval=bound, dtype=jnp.float32)
        params += [w, b]
    return tuple(params)


def _reference_forward(x_nchw, params):
    """Pure-JAX reference mirroring the kernel's bf16/f32 mixed-precision math."""
    w1, b1, w2, b2, w3, b3 = params
    x = x_nchw.reshape(x_nchw.shape[0], IN_DIM).astype(jnp.bfloat16)
    h1 = jnp.maximum(jnp.dot(x, w1.astype(jnp.bfloat16),
                             preferred_element_type=jnp.float32) + b1, 0.0)
    h2 = jnp.maximum(jnp.dot(h1.astype(jnp.bfloat16), w2.astype(jnp.bfloat16),
                             preferred_element_type=jnp.float32) + b2, 0.0)
    return jnp.dot(h2.astype(jnp.bfloat16), w3.astype(jnp.bfloat16),
                   preferred_element_type=jnp.float32) + b3


if __name__ == "__main__":
    key = jax.random.PRNGKey(0)
    k_x, k_p = jax.random.split(key)

    # Small MNIST-like batch: (B=8, C=1, H=28, W=28), NCHW like PyTorch.
    # NOTE: at B=8 the kernel is launch/DMA-overhead bound; benchmark at
    # B >= 1024 to see the tiling / bf16 / lane-padding wins.
    x = jax.random.normal(k_x, (8, 1, 28, 28), dtype=jnp.float32)
    params = init_params(k_p)

    out = net_forward(x, params)
    out = jax.block_until_ready(out)

    ref = _reference_forward(x, params)
    assert out.shape == (8, 10), out.shape
    assert jnp.allclose(out, ref, atol=1e-2, rtol=1e-2), "mismatch vs reference"

    print("KERNEL_OK")
</pallas_src>

<mosaic_0001>
module attributes {stable_mosaic.version = 11 : i64} {
  func.func @_mlp_kernel(%arg0: i32, %arg1: memref<8x896xbf16, #tpu.memory_space<vmem>>, %arg2: memref<896x256xbf16, #tpu.memory_space<vmem>>, %arg3: memref<1x256xf32, #tpu.memory_space<vmem>>, %arg4: memref<256x128xbf16, #tpu.memory_space<vmem>>, %arg5: memref<1x128xf32, #tpu.memory_space<vmem>>, %arg6: memref<128x128xbf16, #tpu.memory_space<vmem>>, %arg7: memref<1x128xf32, #tpu.memory_space<vmem>>, %arg8: memref<8x128xf32, #tpu.memory_space<vmem>>) attributes {dimension_semantics = [#tpu.dimension_semantics<parallel>], iteration_bounds = array<i64: 1>, scalar_prefetch = 0 : i64, scratch_operands = 0 : i64, tpu.core_type = #tpu.core_type<tc>, window_params = [{transform_indices = @transform_0, window_bounds = array<i64: 8, 896>}, {pipeline_mode = #tpu.pipeline_mode<synchronous>, transform_indices = @transform_1, window_bounds = array<i64: 896, 256>}, {pipeline_mode = #tpu.pipeline_mode<synchronous>, transform_indices = @transform_2, window_bounds = array<i64: 1, 256>}, {pipeline_mode = #tpu.pipeline_mode<synchronous>, transform_indices = @transform_3, window_bounds = array<i64: 256, 128>}, {pipeline_mode = #tpu.pipeline_mode<synchronous>, transform_indices = @transform_4, window_bounds = array<i64: 1, 128>}, {pipeline_mode = #tpu.pipeline_mode<synchronous>, transform_indices = @transform_5, window_bounds = array<i64: 128, 128>}, {pipeline_mode = #tpu.pipeline_mode<synchronous>, transform_indices = @transform_6, window_bounds = array<i64: 1, 128>}, {transform_indices = @transform_7, window_bounds = array<i64: 8, 128>}]} {
    %c0 = arith.constant 0 : index
    %c0_0 = arith.constant 0 : index
    %0 = vector.load %arg1[%c0, %c0_0] : memref<8x896xbf16, #tpu.memory_space<vmem>>, vector<8x896xbf16>
    %c0_1 = arith.constant 0 : index
    %c0_2 = arith.constant 0 : index
    %1 = vector.load %arg2[%c0_1, %c0_2] : memref<896x256xbf16, #tpu.memory_space<vmem>>, vector<896x256xbf16>
    %cst = arith.constant dense<0.000000e+00> : vector<8x256xf32>
    %2 = tpu.matmul %0, %1, %cst {dimension_numbers = #tpu.dot_dimension_numbers<[1], [0], [0], [1], [0, 0, 1, 1], [], []>} : vector<8x896xbf16>, vector<896x256xbf16>, vector<8x256xf32> -> vector<8x256xf32>
    %c0_3 = arith.constant 0 : index
    %c0_4 = arith.constant 0 : index
    %3 = vector.load %arg3[%c0_3, %c0_4] : memref<1x256xf32, #tpu.memory_space<vmem>>, vector<1x256xf32>
    %4 = vector.broadcast %3 : vector<1x256xf32> to vector<8x256xf32>
    %5 = arith.addf %2, %4 : vector<8x256xf32>
    %cst_5 = arith.constant 0.000000e+00 : f32
    %6 = vector.broadcast %cst_5 : f32 to vector<8x256xf32>
    %7 = arith.maximumf %5, %6 : vector<8x256xf32>
    %8 = arith.truncf %7 : vector<8x256xf32> to vector<8x256xbf16>
    %c0_6 = arith.constant 0 : index
    %c0_7 = arith.constant 0 : index
    %9 = vector.load %arg4[%c0_6, %c0_7] : memref<256x128xbf16, #tpu.memory_space<vmem>>, vector<256x128xbf16>
    %cst_8 = arith.constant dense<0.000000e+00> : vector<8x128xf32>
    %10 = tpu.matmul %8, %9, %cst_8 {dimension_numbers = #tpu.dot_dimension_numbers<[1], [0], [0], [1], [0, 0, 1, 1], [], []>} : vector<8x256xbf16>, vector<256x128xbf16>, vector<8x128xf32> -> vector<8x128xf32>
    %c0_9 = arith.constant 0 : index
    %c0_10 = arith.constant 0 : index
    %11 = vector.load %arg5[%c0_9, %c0_10] : memref<1x128xf32, #tpu.memory_space<vmem>>, vector<1x128xf32>
    %12 = vector.broadcast %11 : vector<1x128xf32> to vector<8x128xf32>
    %13 = arith.addf %10, %12 : vector<8x128xf32>
    %cst_11 = arith.constant 0.000000e+00 : f32
    %14 = vector.broadcast %cst_11 : f32 to vector<8x128xf32>
    %15 = arith.maximumf %13, %14 : vector<8x128xf32>
    %16 = arith.truncf %15 : vector<8x128xf32> to vector<8x128xbf16>
    %c0_12 = arith.constant 0 : index
    %c0_13 = arith.constant 0 : index
    %17 = vector.load %arg6[%c0_12, %c0_13] : memref<128x128xbf16, #tpu.memory_space<vmem>>, vector<128x128xbf16>
    %cst_14 = arith.constant dense<0.000000e+00> : vector<8x128xf32>
    %18 = tpu.matmul %16, %17, %cst_14 {dimension_numbers = #tpu.dot_dimension_numbers<[1], [0], [0], [1], [0, 0, 1, 1], [], []>} : vector<8x128xbf16>, vector<128x128xbf16>, vector<8x128xf32> -> vector<8x128xf32>
    %c0_15 = arith.constant 0 : index
    %c0_16 = arith.constant 0 : index
    %19 = vector.load %arg7[%c0_15, %c0_16] : memref<1x128xf32, #tpu.memory_space<vmem>>, vector<1x128xf32>
    %20 = vector.broadcast %19 : vector<1x128xf32> to vector<8x128xf32>
    %21 = arith.addf %18, %20 : vector<8x128xf32>
    %c0_17 = arith.constant 0 : index
    %c0_18 = arith.constant 0 : index
    %22 = vector.load %arg8[%c0_17, %c0_18] : memref<8x128xf32, #tpu.memory_space<vmem>>, vector<8x128xf32>
    tpu.vector_store %arg8[%c0_17, %c0_18], %21 {strides = array<i32>} : memref<8x128xf32, #tpu.memory_space<vmem>>, vector<8x128xf32>,
    return
  }
  func.func @transform_0(%arg0: i32) -> (i32, i32) {
    %c0_i32 = arith.constant 0 : i32
    %c0_i32_0 = arith.constant 0 : i32
    return %arg0, %c0_i32 : i32, i32
  }
  func.func @transform_1(%arg0: i32) -> (i32, i32) {
    %c0_i32 = arith.constant 0 : i32
    %c0_i32_0 = arith.constant 0 : i32
    %c0_i32_1 = arith.constant 0 : i32
    return %c0_i32, %c0_i32_0 : i32, i32
  }
  func.func @transform_2(%arg0: i32) -> (i32, i32) {
    %c0_i32 = arith.constant 0 : i32
    %c0_i32_0 = arith.constant 0 : i32
    %c0_i32_1 = arith.constant 0 : i32
    return %c0_i32, %c0_i32_0 : i32, i32
  }
  func.func @transform_3(%arg0: i32) -> (i32, i32) {
    %c0_i32 = arith.constant 0 : i32
    %c0_i32_0 = arith.constant 0 : i32
    %c0_i32_1 = arith.constant 0 : i32
    return %c0_i32, %c0_i32_0 : i32, i32
  }
  func.func @transform_4(%arg0: i32) -> (i32, i32) {
    %c0_i32 = arith.constant 0 : i32
    %c0_i32_0 = arith.constant 0 : i32
    %c0_i32_1 = arith.constant 0 : i32
    return %c0_i32, %c0_i32_0 : i32, i32
  }
  func.func @transform_5(%arg0: i32) -> (i32, i32) {
    %c0_i32 = arith.constant 0 : i32
    %c0_i32_0 = arith.constant 0 : i32
    %c0_i32_1 = arith.constant 0 : i32
    return %c0_i32, %c0_i32_0 : i32, i32
  }
  func.func @transform_6(%arg0: i32) -> (i32, i32) {
    %c0_i32 = arith.constant 0 : i32
    %c0_i32_0 = arith.constant 0 : i32
    %c0_i32_1 = arith.constant 0 : i32
    return %c0_i32, %c0_i32_0 : i32, i32
  }
  func.func @transform_7(%arg0: i32) -> (i32, i32) {
    %c0_i32 = arith.constant 0 : i32
    %c0_i32_0 = arith.constant 0 : i32
    return %arg0, %c0_i32 : i32, i32
  }
}

</mosaic_0001>

<llo_original>
// kernel: tpu_custom_call.1
$region0: #{tpu_custom_call.1}
  #allocation0 [shape = 'u32[]', space=smem, size = 0x4, offset = 0x4, fixed_abs, tag = 'smem constant byte address 0x4 - core index']
  #allocation1 [shape = 'u32[144,128]{1,0:T(1,128)}', space=vmem, size = 0x12000, scoped, tag = 'internal scratch']
  %s0 = inlined_call_operand.hbm [shape: bf16[8,896], index: 0, kind: input, shape index: {}]
  %s1 = inlined_call_operand.hbm [shape: bf16[896,256], index: 1, kind: input, shape index: {}]
  %s2 = inlined_call_operand.vmem [shape: f32[1,256], index: 2, kind: input, shape index: {}]
  %s3 = inlined_call_operand.hbm [shape: bf16[256,128], index: 3, kind: input, shape index: {}]
  %s4 = inlined_call_operand.vmem [shape: f32[1,128], index: 4, kind: input, shape index: {}]
  %s5 = inlined_call_operand.hbm [shape: bf16[128,128], index: 5, kind: input, shape index: {}]
  %s6 = inlined_call_operand.vmem [shape: f32[1,128], index: 6, kind: input, shape index: {}]
  %s7 = inlined_call_operand.hbm [shape: f32[8,128], index: 7, kind: output, shape index: {}]
  %s8 = sld [smem:[#allocation0]]
  $region54: #{tpu_custom_call.1} parent=0
    _
  %s10 = ssub.s32 1, %s8
  %s11 = scalar_select 0, %s10, %s8
  $region1: #{tpu_custom_call.1} parent=0
    #allocation2 [shape = 'u8[14336]{0}', space=vmem, size = 0x3800, scoped, tag = 'input window, operand 0, single buffered']
    #allocation3 [shape = 's32[1]{0}', space=sflag, size = 0x4, scoped, tag = 'scoped memory for tpu_custom_call.1']
    #allocation4 [shape = 's32[1]{0}', space=sflag, size = 0x4, scoped, tag = 'scoped memory for tpu_custom_call.1']
    #allocation5 [shape = 'u8[458752]{0}', space=vmem, size = 0x70000, scoped, tag = 'input window, operand 1, single buffered']
    #allocation6 [shape = 's32[1]{0}', space=sflag, size = 0x4, scoped, tag = 'scoped memory for tpu_custom_call.1']
    #allocation7 [shape = 'u8[65536]{0}', space=vmem, size = 0x10000, scoped, tag = 'input window, operand 3, single buffered']
    #allocation8 [shape = 'u8[32768]{0}', space=vmem, size = 0x8000, scoped, tag = 'input window, operand 5, single buffered']
    #allocation9 [shape = 's32[1]{0}', space=sflag, size = 0x4, scoped, tag = 'scoped memory for tpu_custom_call.1']
    #allocation10 [shape = 'u8[4096]{0}', space=vmem, size = 0x1000, scoped, tag = 'output window, operand 0, single buffered']
    %12 = vsyncpa [#allocation3], 0
    %13 = vsyncpa [#allocation6], 0
    %14 = vsyncpa [#allocation9], 0
    %15 = vsyncpa [#allocation4], 0
    // Predicated region
    $region2: #{tpu_custom_call.1} parent=1 // pred_check
      _
    $region3: #{tpu_custom_call.1} parent=1 // pred_check_branch
      %17 = sbr.rel (0) target = $region5
    $region4: #{tpu_custom_call.1} parent=1 // pred_region
      %s19 = ssub.s32 448, 448
      %20 = vsyncadd [#allocation3], %s19
      %s22 = sshll.u32 [#allocation2], 4
      %s23 = int_to_ptr.vmem [resolvable:$true] %s22
      %25 = dma.hbm_to_vmem [thread:$0]  %s0, 448, %s23, [#allocation3]
    $region5: #{tpu_custom_call.1} parent=1 // pred_fallthru
      _
    // Predicated region
    $region6: #{tpu_custom_call.1} parent=1 // pred_check
      _
    $region7: #{tpu_custom_call.1} parent=1 // pred_check_branch
      %27 = sbr.rel (0) target = $region9
    $region8: #{tpu_custom_call.1} parent=1 // pred_region
      %s29 = ssub.s32 14336, 14336
      %30 = vsyncadd [#allocation6], %s29
      %s31 = sshll.u32 [#allocation5], 4
      %s32 = int_to_ptr.vmem [resolvable:$true] %s31
      %37 = dma.hbm_to_vmem [thread:$0]  %s1, 14336, %s32, [#allocation6], 128, 128, 8
    $region9: #{tpu_custom_call.1} parent=1 // pred_fallthru
      _
    // Predicated region
    $region10: #{tpu_custom_call.1} parent=1 // pred_check
      _
    $region11: #{tpu_custom_call.1} parent=1 // pred_check_branch
      %39 = sbr.rel (0) target = $region13
    $region12: #{tpu_custom_call.1} parent=1 // pred_region
      _
    $region13: #{tpu_custom_call.1} parent=1 // pred_fallthru
      _
    // Predicated region
    $region14: #{tpu_custom_call.1} parent=1 // pred_check
      _
    $region15: #{tpu_custom_call.1} parent=1 // pred_check_branch
      %41 = sbr.rel (0) target = $region17
    $region16: #{tpu_custom_call.1} parent=1 // pred_region
      %s43 = ssub.s32 2048, 2048
      %44 = vsyncadd [#allocation6], %s43
      %s45 = sshll.u32 [#allocation7], 4
      %s46 = int_to_ptr.vmem [resolvable:$true] %s45
      %51 = dma.hbm_to_vmem [thread:$0]  %s3, 2048, %s46, [#allocation6], 64, 64, 4
    $region17: #{tpu_custom_call.1} parent=1 // pred_fallthru
      _
    // Predicated region
    $region18: #{tpu_custom_call.1} parent=1 // pred_check
      _
    $region19: #{tpu_custom_call.1} parent=1 // pred_check_branch
      %53 = sbr.rel (0) target = $region21
    $region20: #{tpu_custom_call.1} parent=1 // pred_region
      _
    $region21: #{tpu_custom_call.1} parent=1 // pred_fallthru
      _
    // Predicated region
    $region22: #{tpu_custom_call.1} parent=1 // pred_check
      _
    $region23: #{tpu_custom_call.1} parent=1 // pred_check_branch
      %55 = sbr.rel (0) target = $region25
    $region24: #{tpu_custom_call.1} parent=1 // pred_region
      %s57 = ssub.s32 1024, 1024
      %58 = vsyncadd [#allocation9], %s57
      %s59 = sshll.u32 [#allocation8], 4
      %s60 = int_to_ptr.vmem [resolvable:$true] %s59
      %65 = dma.hbm_to_vmem [thread:$0]  %s5, 1024, %s60, [#allocation9], 64, 64, 4
    $region25: #{tpu_custom_call.1} parent=1 // pred_fallthru
      _
    // Predicated region
    $region26: #{tpu_custom_call.1} parent=1 // pred_check
      _
    $region27: #{tpu_custom_call.1} parent=1 // pred_check_branch
      %67 = sbr.rel (0) target = $region29
    $region28: #{tpu_custom_call.1} parent=1 // pred_region
      _
    $region29: #{tpu_custom_call.1} parent=1 // pred_fallthru
      _
    // Predicated region
    $region30: #{tpu_custom_call.1} parent=1 // pred_check
      _
    $region31: #{tpu_custom_call.1} parent=1 // pred_check_branch
      %69 = sbr.rel (0) target = $region33
    $region32: #{tpu_custom_call.1} parent=1 // pred_region
      %70 = dma.done [#allocation3], 448
    $region33: #{tpu_custom_call.1} parent=1 // pred_fallthru
      _
    // Predicated region
    $region34: #{tpu_custom_call.1} parent=1 // pred_check
      _
    $region35: #{tpu_custom_call.1} parent=1 // pred_check_branch
      %72 = sbr.rel (0) target = $region37
    $region36: #{tpu_custom_call.1} parent=1 // pred_region
      %73 = dma.done [#allocation6], 14336
    $region37: #{tpu_custom_call.1} parent=1 // pred_fallthru
      _
    // Predicated region
    $region38: #{tpu_custom_call.1} parent=1 // pred_check
      _
    $region39: #{tpu_custom_call.1} parent=1 // pred_check_branch
      %75 = sbr.rel (0) target = $region41
    $region40: #{tpu_custom_call.1} parent=1 // pred_region
      %76 = dma.done [#allocation6], 2048
    $region41: #{tpu_custom_call.1} parent=1 // pred_fallthru
      _
    // Predicated region
    $region42: #{tpu_custom_call.1} parent=1 // pred_check
      _
    $region43: #{tpu_custom_call.1} parent=1 // pred_check_branch
      %78 = sbr.rel (0) target = $region45
    $region44: #{tpu_custom_call.1} parent=1 // pred_region
      %79 = dma.done [#allocation9], 1024
    $region45: #{tpu_custom_call.1} parent=1 // pred_fallthru
      _
    %v81 = vld [vmem:[#allocation2] sm:$0xff]
    %v82 = vld [vmem:[#allocation2 + $0x8] sm:$0xff]
    %v83 = vld [vmem:[#allocation2 + $0x10] sm:$0xff]
    %v84 = vld [vmem:[#allocation2 + $0x18] sm:$0xf]
    %v85 = vld [vmem:[#allocation5] sm:$0xff]
    %v86 = vld [vmem:[#allocation5 + $0x8] sm:$0xff]
    %v87 = vld [vmem:[#allocation5 + $0x10] sm:$0xff]
    %v88 = vld [vmem:[#allocation5 + $0x18] sm:$0xff]
    %v89 = vld [vmem:[#allocation5 + $0x20] sm:$0xff]
    %v90 = vld [vmem:[#allocation5 + $0x28] sm:$0xff]
    %v91 = vld [vmem:[#allocation5 + $0x30] sm:$0xff]
    %v92 = vld [vmem:[#allocation5 + $0x38] sm:$0xff]
    %v93 = vld [vmem:[#allocation5 + $0x40] sm:$0xff]
    %v94 = vld [vmem:[#allocation5 + $0x48] sm:$0xff]
    %v95 = vld [vmem:[#allocation5 + $0x50] sm:$0xff]
    %v96 = vld [vmem:[#allocation5 + $0x58] sm:$0xff]
    %v97 = vld [vmem:[#allocation5 + $0x60] sm:$0xff]
    %v98 = vld [vmem:[#allocation5 + $0x68] sm:$0xff]
    %v99 = vld [vmem:[#allocation5 + $0x70] sm:$0xff]
    %v100 = vld [vmem:[#allocation5 + $0x78] sm:$0xff]
    %v101 = vld [vmem:[#allocation5 + $0x80] sm:$0xff]
    %v102 = vld [vmem:[#allocation5 + $0x88] sm:$0xff]
    %v103 = vld [vmem:[#allocation5 + $0x90] sm:$0xff]
    %v104 = vld [vmem:[#allocation5 + $0x98] sm:$0xff]
    %v105 = vld [vmem:[#allocation5 + $0xa0] sm:$0xff]
    %v106 = vld [vmem:[#allocation5 + $0xa8] sm:$0xff]
    %v107 = vld [vmem:[#allocation5 + $0xb0] sm:$0xff]
    %v108 = vld [vmem:[#allocation5 + $0xb8] sm:$0xff]
    %v109 = vld [vmem:[#allocation5 + $0xc0] sm:$0xff]
    %v110 = vld [vmem:[#allocation5 + $0xc8] sm:$0xff]
    %v111 = vld [vmem:[#allocation5 + $0xd0] sm:$0xff]
    %v112 = vld [vmem:[#allocation5 + $0xd8] sm:$0xff]
    %v113 = vld [vmem:[#allocation5 + $0xe0] sm:$0xff]
    %v114 = vld [vmem:[#allocation5 + $0xe8] sm:$0xff]
    %v115 = vld [vmem:[#allocation5 + $0xf0] sm:$0xff]
    %v116 = vld [vmem:[#allocation5 + $0xf8] sm:$0xff]
    %v117 = vld [vmem:[#allocation5 + $0x100] sm:$0xff]
    %v118 = vld [vmem:[#allocation5 + $0x108] sm:$0xff]
    %v119 = vld [vmem:[#allocation5 + $0x110] sm:$0xff]
    %v120 = vld [vmem:[#allocation5 + $0x118] sm:$0xff]
    %v121 = vld [vmem:[#allocation5 + $0x120] sm:$0xff]
    %v122 = vld [vmem:[#allocation5 + $0x128] sm:$0xff]
    %v123 = vld [vmem:[#allocation5 + $0x130] sm:$0xff]
    %v124 = vld [vmem:[#allocation5 + $0x138] sm:$0xff]
    %v125 = vld [vmem:[#allocation5 + $0x140] sm:$0xff]
    %v126 = vld [vmem:[#allocation5 + $0x148] sm:$0xff]
    %v127 = vld [vmem:[#allocation5 + $0x150] sm:$0xff]
    %v128 = vld [vmem:[#allocation5 + $0x158] sm:$0xff]
    %v129 = vld [vmem:[#allocation5 + $0x160] sm:$0xff]
    %v130 = vld [vmem:[#allocation5 + $0x168] sm:$0xff]
    %v131 = vld [vmem:[#allocation5 + $0x170] sm:$0xff]
    %v132 = vld [vmem:[#allocation5 + $0x178] sm:$0xff]
    %v133 = vld [vmem:[#allocation5 + $0x180] sm:$0xff]
    %v134 = vld [vmem:[#allocation5 + $0x188] sm:$0xff]
    %v135 = vld [vmem:[#allocation5 + $0x190] sm:$0xff]
    %v136 = vld [vmem:[#allocation5 + $0x198] sm:$0xff]
    %v137 = vld [vmem:[#allocation5 + $0x1a0] sm:$0xff]
    %v138 = vld [vmem:[#allocation5 + $0x1a8] sm:$0xff]
    %v139 = vld [vmem:[#allocation5 + $0x1b0] sm:$0xff]
    %v140 = vld [vmem:[#allocation5 + $0x1b8] sm:$0xff]
    %v141 = vld [vmem:[#allocation5 + $0x1c0] sm:$0xff]
    %v142 = vld [vmem:[#allocation5 + $0x1c8] sm:$0xff]
    %v143 = vld [vmem:[#allocation5 + $0x1d0] sm:$0xff]
    %v144 = vld [vmem:[#allocation5 + $0x1d8] sm:$0xff]
    %v145 = vld [vmem:[#allocation5 + $0x1e0] sm:$0xff]
    %v146 = vld [vmem:[#allocation5 + $0x1e8] sm:$0xff]
    %v147 = vld [vmem:[#allocation5 + $0x1f0] sm:$0xff]
    %v148 = vld [vmem:[#allocation5 + $0x1f8] sm:$0xff]
    %v149 = vld [vmem:[#allocation5 + $0x200] sm:$0xff]
    %v150 = vld [vmem:[#allocation5 + $0x208] sm:$0xff]
    %v151 = vld [vmem:[#allocation5 + $0x210] sm:$0xff]
    %v152 = vld [vmem:[#allocation5 + $0x218] sm:$0xff]
    %v153 = vld [vmem:[#allocation5 + $0x220] sm:$0xff]
    %v154 = vld [vmem:[#allocation5 + $0x228] sm:$0xff]
    %v155 = vld [vmem:[#allocation5 + $0x230] sm:$0xff]
    %v156 = vld [vmem:[#allocation5 + $0x238] sm:$0xff]
    %v157 = vld [vmem:[#allocation5 + $0x240] sm:$0xff]
    %v158 = vld [vmem:[#allocation5 + $0x248] sm:$0xff]
    %v159 = vld [vmem:[#allocation5 + $0x250] sm:$0xff]
    %v160 = vld [vmem:[#allocation5 + $0x258] sm:$0xff]
    %v161 = vld [vmem:[#allocation5 + $0x260] sm:$0xff]
    %v162 = vld [vmem:[#allocation5 + $0x268] sm:$0xff]
    %v163 = vld [vmem:[#allocation5 + $0x270] sm:$0xff]
    %v164 = vld [vmem:[#allocation5 + $0x278] sm:$0xff]
    %v165 = vld [vmem:[#allocation5 + $0x280] sm:$0xff]
    %v166 = vld [vmem:[#allocation5 + $0x288] sm:$0xff]
    %v167 = vld [vmem:[#allocation5 + $0x290] sm:$0xff]
    %v168 = vld [vmem:[#allocation5 + $0x298] sm:$0xff]
    %v169 = vld [vmem:[#allocation5 + $0x2a0] sm:$0xff]
    %v170 = vld [vmem:[#allocation5 + $0x2a8] sm:$0xff]
    %v171 = vld [vmem:[#allocation5 + $0x2b0] sm:$0xff]
    %v172 = vld [vmem:[#allocation5 + $0x2b8] sm:$0xff]
    %v173 = vld [vmem:[#allocation5 + $0x2c0] sm:$0xff]
    %v174 = vld [vmem:[#allocation5 + $0x2c8] sm:$0xff]
    %v175 = vld [vmem:[#allocation5 + $0x2d0] sm:$0xff]
    %v176 = vld [vmem:[#allocation5 + $0x2d8] sm:$0xff]
    %v177 = vld [vmem:[#allocation5 + $0x2e0] sm:$0xff]
    %v178 = vld [vmem:[#allocation5 + $0x2e8] sm:$0xff]
    %v179 = vld [vmem:[#allocation5 + $0x2f0] sm:$0xff]
    %v180 = vld [vmem:[#allocation5 + $0x2f8] sm:$0xff]
    %v181 = vld [vmem:[#allocation5 + $0x300] sm:$0xff]
    %v182 = vld [vmem:[#allocation5 + $0x308] sm:$0xff]
    %v183 = vld [vmem:[#allocation5 + $0x310] sm:$0xff]
    %v184 = vld [vmem:[#allocation5 + $0x318] sm:$0xff]
    %v185 = vld [vmem:[#allocation5 + $0x320] sm:$0xff]
    %v186 = vld [vmem:[#allocation5 + $0x328] sm:$0xff]
    %v187 = vld [vmem:[#allocation5 + $0x330] sm:$0xff]
    %v188 = vld [vmem:[#allocation5 + $0x338] sm:$0xff]
    %v189 = vld [vmem:[#allocation5 + $0x340] sm:$0xff]
    %v190 = vld [vmem:[#allocation5 + $0x348] sm:$0xff]
    %v191 = vld [vmem:[#allocation5 + $0x350] sm:$0xff]
    %v192 = vld [vmem:[#allocation5 + $0x358] sm:$0xff]
    %v193 = vld [vmem:[#allocation5 + $0x360] sm:$0xff]
    %v194 = vld [vmem:[#allocation5 + $0x368] sm:$0xff]
    %v195 = vld [vmem:[#allocation5 + $0x370] sm:$0xff]
    %v196 = vld [vmem:[#allocation5 + $0x378] sm:$0xff]
    %v197 = vld [vmem:[%s2] sm:$0x3]
    %v199 = vlaneseq
    %v200 = vshrl.u32 %v199, 7
    %v201 = vsub.s32 0, %v200
    %v202 = vrot.slane %v197, %v201
    %v203 = vlaneseq
    %v204 = vshrl.u32 %v203, 7
    %v205 = vsub.s32 1, %v204
    %v206 = vrot.slane %v197, %v205
    %v213 = vunpack.c.l.b16 %v81
    %v214 = vunpack.c.h.b16 %v81
    %v215 = vunpack.c.l.b16 %v82
    %v216 = vunpack.c.h.b16 %v82
    %v217 = vunpack.c.l.b16 %v83
    %v218 = vunpack.c.h.b16 %v83
    %v219 = vunpack.c.l.b16 %v84
    %v220 = vpack.c.b16 %v213, %v213
    %v221 = vpack.c.b16 %v214, %v214
    %v222 = vpack.c.b16 %v215, %v215
    %v223 = vpack.c.b16 %v216, %v216
    %v224 = vpack.c.b16 %v217, %v217
    %v225 = vpack.c.b16 %v218, %v218
    %v226 = vpack.c.b16 %v219, %v219
    %v346 = vunpack.c.l.b16 %v85
    %v347 = vunpack.c.h.b16 %v85
    %v348 = vunpack.c.l.b16 %v86
    %v349 = vunpack.c.h.b16 %v86
    %v350 = vunpack.c.l.b16 %v87
    %v351 = vunpack.c.h.b16 %v87
    %v352 = vunpack.c.l.b16 %v88
    %v353 = vunpack.c.h.b16 %v88
    %v354 = vunpack.c.l.b16 %v89
    %v355 = vunpack.c.h.b16 %v89
    %v356 = vunpack.c.l.b16 %v90
    %v357 = vunpack.c.h.b16 %v90
    %v358 = vunpack.c.l.b16 %v91
    %v359 = vunpack.c.h.b16 %v91
    %v360 = vunpack.c.l.b16 %v92
    %v361 = vunpack.c.h.b16 %v92
    %v362 = vunpack.c.l.b16 %v93
    %v363 = vunpack.c.h.b16 %v93
    %v364 = vunpack.c.l.b16 %v94
    %v365 = vunpack.c.h.b16 %v94
    %v366 = vunpack.c.l.b16 %v95
    %v367 = vunpack.c.h.b16 %v95
    %v368 = vunpack.c.l.b16 %v96
    %v369 = vunpack.c.h.b16 %v96
    %v370 = vunpack.c.l.b16 %v97
    %v371 = vunpack.c.h.b16 %v97
    %v372 = vunpack.c.l.b16 %v98
    %v373 = vunpack.c.h.b16 %v98
    %v374 = vunpack.c.l.b16 %v99
    %v375 = vunpack.c.h.b16 %v99
    %v376 = vunpack.c.l.b16 %v100
    %v377 = vunpack.c.h.b16 %v100
    %v378 = vunpack.c.l.b16 %v101
    %v379 = vunpack.c.h.b16 %v101
    %v380 = vunpack.c.l.b16 %v102
    %v381 = vunpack.c.h.b16 %v102
    %v382 = vunpack.c.l.b16 %v103
    %v383 = vunpack.c.h.b16 %v103
    %v384 = vunpack.c.l.b16 %v104
    %v385 = vunpack.c.h.b16 %v104
    %v386 = vunpack.c.l.b16 %v105
    %v387 = vunpack.c.h.b16 %v105
    %v388 = vunpack.c.l.b16 %v106
    %v389 = vunpack.c.h.b16 %v106
    %v390 = vunpack.c.l.b16 %v107
    %v391 = vunpack.c.h.b16 %v107
    %v392 = vunpack.c.l.b16 %v108
    %v393 = vunpack.c.h.b16 %v108
    %v394 = vunpack.c.l.b16 %v109
    %v395 = vunpack.c.h.b16 %v109
    %v396 = vunpack.c.l.b16 %v110
    %v397 = vunpack.c.h.b16 %v110
    %v398 = vunpack.c.l.b16 %v111
    %v399 = vunpack.c.h.b16 %v111
    %v400 = vunpack.c.l.b16 %v112
    %v401 = vunpack.c.h.b16 %v112
    %v402 = vunpack.c.l.b16 %v113
    %v403 = vunpack.c.h.b16 %v113
    %v404 = vunpack.c.l.b16 %v114
    %v405 = vunpack.c.h.b16 %v114
    %v406 = vunpack.c.l.b16 %v115
    %v407 = vunpack.c.h.b16 %v115
    %v408 = vunpack.c.l.b16 %v116
    %v409 = vunpack.c.h.b16 %v116
    %v410 = vunpack.c.l.b16 %v117
    %v411 = vunpack.c.h.b16 %v117
    %v412 = vunpack.c.l.b16 %v118
    %v413 = vunpack.c.h.b16 %v118
    %v414 = vunpack.c.l.b16 %v119
    %v415 = vunpack.c.h.b16 %v119
    %v416 = vunpack.c.l.b16 %v120
    %v417 = vunpack.c.h.b16 %v120
    %v418 = vunpack.c.l.b16 %v121
    %v419 = vunpack.c.h.b16 %v121
    %v420 = vunpack.c.l.b16 %v122
    %v421 = vunpack.c.h.b16 %v122
    %v422 = vunpack.c.l.b16 %v123
    %v423 = vunpack.c.h.b16 %v123
    %v424 = vunpack.c.l.b16 %v124
    %v425 = vunpack.c.h.b16 %v124
    %v426 = vunpack.c.l.b16 %v125
    %v427 = vunpack.c.h.b16 %v125
    %v428 = vunpack.c.l.b16 %v126
    %v429 = vunpack.c.h.b16 %v126
    %v430 = vunpack.c.l.b16 %v127
    %v431 = vunpack.c.h.b16 %v127
    %v432 = vunpack.c.l.b16 %v128
    %v433 = vunpack.c.h.b16 %v128
    %v434 = vunpack.c.l.b16 %v129
    %v435 = vunpack.c.h.b16 %v129
    %v436 = vunpack.c.l.b16 %v130
    %v437 = vunpack.c.h.b16 %v130
    %v438 = vunpack.c.l.b16 %v131
    %v439 = vunpack.c.h.b16 %v131
    %v440 = vunpack.c.l.b16 %v132
    %v441 = vunpack.c.h.b16 %v132
    %v442 = vunpack.c.l.b16 %v133
    %v443 = vunpack.c.h.b16 %v133
    %v444 = vunpack.c.l.b16 %v134
    %v445 = vunpack.c.h.b16 %v134
    %v446 = vunpack.c.l.b16 %v135
    %v447 = vunpack.c.h.b16 %v135
    %v448 = vunpack.c.l.b16 %v136
    %v449 = vunpack.c.h.b16 %v136
    %v450 = vunpack.c.l.b16 %v137
    %v451 = vunpack.c.h.b16 %v137
    %v452 = vunpack.c.l.b16 %v138
    %v453 = vunpack.c.h.b16 %v138
    %v454 = vunpack.c.l.b16 %v139
    %v455 = vunpack.c.h.b16 %v139
    %v456 = vunpack.c.l.b16 %v140
    %v457 = vunpack.c.h.b16 %v140
    %v458 = vunpack.c.l.b16 %v141
    %v459 = vunpack.c.h.b16 %v141
    %v460 = vunpack.c.l.b16 %v142
    %v461 = vunpack.c.h.b16 %v142
    %v462 = vunpack.c.l.b16 %v143
    %v463 = vunpack.c.h.b16 %v143
    %v464 = vunpack.c.l.b16 %v144
    %v465 = vunpack.c.h.b16 %v144
    %v466 = vunpack.c.l.b16 %v145
    %v467 = vunpack.c.h.b16 %v145
    %v468 = vunpack.c.l.b16 %v146
    %v469 = vunpack.c.h.b16 %v146
    %v470 = vunpack.c.l.b16 %v147
    %v471 = vunpack.c.h.b16 %v147
    %v472 = vunpack.c.l.b16 %v148
    %v473 = vunpack.c.h.b16 %v148
    %v474 = vunpack.c.l.b16 %v149
    %v475 = vunpack.c.h.b16 %v149
    %v476 = vunpack.c.l.b16 %v150
    %v477 = vunpack.c.h.b16 %v150
    %v478 = vunpack.c.l.b16 %v151
    %v479 = vunpack.c.h.b16 %v151
    %v480 = vunpack.c.l.b16 %v152
    %v481 = vunpack.c.h.b16 %v152
    %v482 = vunpack.c.l.b16 %v153
    %v483 = vunpack.c.h.b16 %v153
    %v484 = vunpack.c.l.b16 %v154
    %v485 = vunpack.c.h.b16 %v154
    %v486 = vunpack.c.l.b16 %v155
    %v487 = vunpack.c.h.b16 %v155
    %v488 = vunpack.c.l.b16 %v156
    %v489 = vunpack.c.h.b16 %v156
    %v490 = vunpack.c.l.b16 %v157
    %v491 = vunpack.c.h.b16 %v157
    %v492 = vunpack.c.l.b16 %v158
    %v493 = vunpack.c.h.b16 %v158
    %v494 = vunpack.c.l.b16 %v159
    %v495 = vunpack.c.h.b16 %v159
    %v496 = vunpack.c.l.b16 %v160
    %v497 = vunpack.c.h.b16 %v160
    %v498 = vunpack.c.l.b16 %v161
    %v499 = vunpack.c.h.b16 %v161
    %v500 = vunpack.c.l.b16 %v162
    %v501 = vunpack.c.h.b16 %v162
    %v502 = vunpack.c.l.b16 %v163
    %v503 = vunpack.c.h.b16 %v163
    %v504 = vunpack.c.l.b16 %v164
    %v505 = vunpack.c.h.b16 %v164
    %v506 = vunpack.c.l.b16 %v165
    %v507 = vunpack.c.h.b16 %v165
    %v508 = vunpack.c.l.b16 %v166
    %v509 = vunpack.c.h.b16 %v166
    %v510 = vunpack.c.l.b16 %v167
    %v511 = vunpack.c.h.b16 %v167
    %v512 = vunpack.c.l.b16 %v168
    %v513 = vunpack.c.h.b16 %v168
    %v514 = vunpack.c.l.b16 %v169
    %v515 = vunpack.c.h.b16 %v169
    %v516 = vunpack.c.l.b16 %v170
    %v517 = vunpack.c.h.b16 %v170
    %v518 = vunpack.c.l.b16 %v171
    %v519 = vunpack.c.h.b16 %v171
    %v520 = vunpack.c.l.b16 %v172
    %v521 = vunpack.c.h.b16 %v172
    %v522 = vunpack.c.l.b16 %v173
    %v523 = vunpack.c.h.b16 %v173
    %v524 = vunpack.c.l.b16 %v174
    %v525 = vunpack.c.h.b16 %v174
    %v526 = vunpack.c.l.b16 %v175
    %v527 = vunpack.c.h.b16 %v175
    %v528 = vunpack.c.l.b16 %v176
    %v529 = vunpack.c.h.b16 %v176
    %v530 = vunpack.c.l.b16 %v177
    %v531 = vunpack.c.h.b16 %v177
    %v532 = vunpack.c.l.b16 %v178
    %v533 = vunpack.c.h.b16 %v178
    %v534 = vunpack.c.l.b16 %v179
    %v535 = vunpack.c.h.b16 %v179
    %v536 = vunpack.c.l.b16 %v180
    %v537 = vunpack.c.h.b16 %v180
    %v538 = vunpack.c.l.b16 %v181
    %v539 = vunpack.c.h.b16 %v181
    %v540 = vunpack.c.l.b16 %v182
    %v541 = vunpack.c.h.b16 %v182
    %v542 = vunpack.c.l.b16 %v183
    %v543 = vunpack.c.h.b16 %v183
    %v544 = vunpack.c.l.b16 %v184
    %v545 = vunpack.c.h.b16 %v184
    %v546 = vunpack.c.l.b16 %v185
    %v547 = vunpack.c.h.b16 %v185
    %v548 = vunpack.c.l.b16 %v186
    %v549 = vunpack.c.h.b16 %v186
    %v550 = vunpack.c.l.b16 %v187
    %v551 = vunpack.c.h.b16 %v187
    %v552 = vunpack.c.l.b16 %v188
    %v553 = vunpack.c.h.b16 %v188
    %v554 = vunpack.c.l.b16 %v189
    %v555 = vunpack.c.h.b16 %v189
    %v556 = vunpack.c.l.b16 %v190
    %v557 = vunpack.c.h.b16 %v190
    %v558 = vunpack.c.l.b16 %v191
    %v559 = vunpack.c.h.b16 %v191
    %v560 = vunpack.c.l.b16 %v192
    %v561 = vunpack.c.h.b16 %v192
    %v562 = vunpack.c.l.b16 %v193
    %v563 = vunpack.c.h.b16 %v193
    %v564 = vunpack.c.l.b16 %v194
    %v565 = vunpack.c.h.b16 %v194
    %v566 = vunpack.c.l.b16 %v195
    %v567 = vunpack.c.h.b16 %v195
    %v568 = vunpack.c.l.b16 %v196
    %v569 = vunpack.c.h.b16 %v196
    %v570 = vpack.c.b16 %v348, %v346
    %v571 = vpack.c.b16 %v349, %v347
    %v572 = vpack.c.b16 %v352, %v350
    %v573 = vpack.c.b16 %v353, %v351
    %v574 = vpack.c.b16 %v356, %v354
    %v575 = vpack.c.b16 %v357, %v355
    %v576 = vpack.c.b16 %v360, %v358
    %v577 = vpack.c.b16 %v361, %v359
    %v578 = vpack.c.b16 %v364, %v362
    %v579 = vpack.c.b16 %v365, %v363
    %v580 = vpack.c.b16 %v368, %v366
    %v581 = vpack.c.b16 %v369, %v367
    %v582 = vpack.c.b16 %v372, %v370
    %v583 = vpack.c.b16 %v373, %v371
    %v584 = vpack.c.b16 %v376, %v374
    %v585 = vpack.c.b16 %v377, %v375
    %v586 = vpack.c.b16 %v380, %v378
    %v587 = vpack.c.b16 %v381, %v379
    %v588 = vpack.c.b16 %v384, %v382
    %v589 = vpack.c.b16 %v385, %v383
    %v590 = vpack.c.b16 %v388, %v386
    %v591 = vpack.c.b16 %v389, %v387
    %v592 = vpack.c.b16 %v392, %v390
    %v593 = vpack.c.b16 %v393, %v391
    %v594 = vpack.c.b16 %v396, %v394
    %v595 = vpack.c.b16 %v397, %v395
    %v596 = vpack.c.b16 %v400, %v398
    %v597 = vpack.c.b16 %v401, %v399
    %v598 = vpack.c.b16 %v404, %v402
    %v599 = vpack.c.b16 %v405, %v403
    %v600 = vpack.c.b16 %v408, %v406
    %v601 = vpack.c.b16 %v409, %v407
    %v602 = vpack.c.b16 %v412, %v410
    %v603 = vpack.c.b16 %v413, %v411
    %v604 = vpack.c.b16 %v416, %v414
    %v605 = vpack.c.b16 %v417, %v415
    %v606 = vpack.c.b16 %v420, %v418
    %v607 = vpack.c.b16 %v421, %v419
    %v608 = vpack.c.b16 %v424, %v422
    %v609 = vpack.c.b16 %v425, %v423
    %v610 = vpack.c.b16 %v428, %v426
    %v611 = vpack.c.b16 %v429, %v427
    %v612 = vpack.c.b16 %v432, %v430
    %v613 = vpack.c.b16 %v433, %v431
    %v614 = vpack.c.b16 %v436, %v434
    %v615 = vpack.c.b16 %v437, %v435
    %v616 = vpack.c.b16 %v440, %v438
    %v617 = vpack.c.b16 %v441, %v439
    %v618 = vpack.c.b16 %v444, %v442
    %v619 = vpack.c.b16 %v445, %v443
    %v620 = vpack.c.b16 %v448, %v446
    %v621 = vpack.c.b16 %v449, %v447
    %v622 = vpack.c.b16 %v452, %v450
    %v623 = vpack.c.b16 %v453, %v451
    %v624 = vpack.c.b16 %v456, %v454
    %v625 = vpack.c.b16 %v457, %v455
    %v626 = vpack.c.b16 %v460, %v458
    %v627 = vpack.c.b16 %v461, %v459
    %v628 = vpack.c.b16 %v464, %v462
    %v629 = vpack.c.b16 %v465, %v463
    %v630 = vpack.c.b16 %v468, %v466
    %v631 = vpack.c.b16 %v469, %v467
    %v632 = vpack.c.b16 %v472, %v470
    %v633 = vpack.c.b16 %v473, %v471
    %v634 = vpack.c.b16 %v476, %v474
    %v635 = vpack.c.b16 %v477, %v475
    %v636 = vpack.c.b16 %v480, %v478
    %v637 = vpack.c.b16 %v481, %v479
    %v638 = vpack.c.b16 %v484, %v482
    %v639 = vpack.c.b16 %v485, %v483
    %v640 = vpack.c.b16 %v488, %v486
    %v641 = vpack.c.b16 %v489, %v487
    %v642 = vpack.c.b16 %v492, %v490
    %v643 = vpack.c.b16 %v493, %v491
    %v644 = vpack.c.b16 %v496, %v494
    %v645 = vpack.c.b16 %v497, %v495
    %v646 = vpack.c.b16 %v500, %v498
    %v647 = vpack.c.b16 %v501, %v499
    %v648 = vpack.c.b16 %v504, %v502
    %v649 = vpack.c.b16 %v505, %v503
    %v650 = vpack.c.b16 %v508, %v506
    %v651 = vpack.c.b16 %v509, %v507
    %v652 = vpack.c.b16 %v512, %v510
    %v653 = vpack.c.b16 %v513, %v511
    %v654 = vpack.c.b16 %v516, %v514
    %v655 = vpack.c.b16 %v517, %v515
    %v656 = vpack.c.b16 %v520, %v518
    %v657 = vpack.c.b16 %v521, %v519
    %v658 = vpack.c.b16 %v524, %v522
    %v659 = vpack.c.b16 %v525, %v523
    %v660 = vpack.c.b16 %v528, %v526
    %v661 = vpack.c.b16 %v529, %v527
    %v662 = vpack.c.b16 %v532, %v530
    %v663 = vpack.c.b16 %v533, %v531
    %v664 = vpack.c.b16 %v536, %v534
    %v665 = vpack.c.b16 %v537, %v535
    %v666 = vpack.c.b16 %v540, %v538
    %v667 = vpack.c.b16 %v541, %v539
    %v668 = vpack.c.b16 %v544, %v542
    %v669 = vpack.c.b16 %v545, %v543
    %v670 = vpack.c.b16 %v548, %v546
    %v671 = vpack.c.b16 %v549, %v547
    %v672 = vpack.c.b16 %v552, %v550
    %v673 = vpack.c.b16 %v553, %v551
    %v674 = vpack.c.b16 %v556, %v554
    %v675 = vpack.c.b16 %v557, %v555
    %v676 = vpack.c.b16 %v560, %v558
    %v677 = vpack.c.b16 %v561, %v559
    %v678 = vpack.c.b16 %v564, %v562
    %v679 = vpack.c.b16 %v565, %v563
    %v680 = vpack.c.b16 %v568, %v566
    %v681 = vpack.c.b16 %v569, %v567
    %794 = vmatprep.subr.bf16.mxu0 %v585
    %795 = vmatpush1.bf16.msra.mxu0 %v584
    %796 = vmatprep.subr.bf16.mxu0 %v583
    %797 = vmatpush1.bf16.msra.mxu0 %v582
    %798 = vmatprep.subr.bf16.mxu0 %v581
    %799 = vmatpush1.bf16.msra.mxu0 %v580
    %800 = vmatprep.subr.bf16.mxu0 %v579
    %801 = vmatpush1.bf16.msra.mxu0 %v578
    %802 = vmatprep.subr.bf16.mxu0 %v577
    %803 = vmatpush1.bf16.msra.mxu0 %v576
    %804 = vmatprep.subr.bf16.mxu0 %v575
    %805 = vmatpush1.bf16.msra.mxu0 %v574
    %806 = vmatprep.subr.bf16.mxu0 %v573
    %807 = vmatpush1.bf16.msra.mxu0 %v572
    %808 = vmatprep.subr.bf16.mxu0 %v571
    %809 = vmatpush1.bf16.msra.mxu0 %v570
    %810 = vmatprep.subr.bf16.mxu0 %v601
    %811 = vmatpush2.bf16.msra.mxu0 %v600
    %812 = vmatprep.subr.bf16.mxu0 %v599
    %813 = vmatpush2.bf16.msra.mxu0 %v598
    %814 = vmatprep.subr.bf16.mxu0 %v597
    %815 = vmatpush2.bf16.msra.mxu0 %v596
    %816 = vmatprep.subr.bf16.mxu0 %v595
    %817 = vmatpush2.bf16.msra.mxu0 %v594
    %818 = vmatprep.subr.bf16.mxu0 %v593
    %819 = vmatpush2.bf16.msra.mxu0 %v592
    %820 = vmatprep.subr.bf16.mxu0 %v591
    %821 = vmatpush2.bf16.msra.mxu0 %v590
    %822 = vmatprep.subr.bf16.mxu0 %v589
    %823 = vmatpush2.bf16.msra.mxu0 %v588
    %824 = vmatprep.subr.bf16.mxu0 %v587
    %825 = vmatpush2.bf16.msra.mxu0 %v586
    %826 = vmatprep.mubr.bf16.mxu0 %v221
    %827 = vmatmul.mubr.bf16.gmra.mxu0 %v220
    %v828 = vpop.f32.mrf.mxu0
    %v829 = vadd.f32 %v202, %v828
    %v830 = vpop.f32.mrf.mxu0
    %v831 = vadd.f32 %v206, %v830
    %v832 = vpop.f32.mrf.mxu0
    %v833 = vpop.f32.mrf.mxu0
    %834 = vdwg.mxu0
    %835 = vmatprep.subr.bf16.mxu0 %v617
    %836 = vmatpush1.bf16.msra.mxu0 %v616
    %837 = vmatprep.subr.bf16.mxu0 %v615
    %838 = vmatpush1.bf16.msra.mxu0 %v614
    %839 = vmatprep.subr.bf16.mxu0 %v613
    %840 = vmatpush1.bf16.msra.mxu0 %v612
    %841 = vmatprep.subr.bf16.mxu0 %v611
    %842 = vmatpush1.bf16.msra.mxu0 %v610
    %843 = vmatprep.subr.bf16.mxu0 %v609
    %844 = vmatpush1.bf16.msra.mxu0 %v608
    %845 = vmatprep.subr.bf16.mxu0 %v607
    %846 = vmatpush1.bf16.msra.mxu0 %v606
    %847 = vmatprep.subr.bf16.mxu0 %v605
    %848 = vmatpush1.bf16.msra.mxu0 %v604
    %849 = vmatprep.subr.bf16.mxu0 %v603
    %850 = vmatpush1.bf16.msra.mxu0 %v602
    %851 = vmatprep.subr.bf16.mxu0 %v633
    %852 = vmatpush2.bf16.msra.mxu0 %v632
    %853 = vmatprep.subr.bf16.mxu0 %v631
    %854 = vmatpush2.bf16.msra.mxu0 %v630
    %855 = vmatprep.subr.bf16.mxu0 %v629
    %856 = vmatpush2.bf16.msra.mxu0 %v628
    %857 = vmatprep.subr.bf16.mxu0 %v627
    %858 = vmatpush2.bf16.msra.mxu0 %v626
    %859 = vmatprep.subr.bf16.mxu0 %v625
    %860 = vmatpush2.bf16.msra.mxu0 %v624
    %861 = vmatprep.subr.bf16.mxu0 %v623
    %862 = vmatpush2.bf16.msra.mxu0 %v622
    %863 = vmatprep.subr.bf16.mxu0 %v621
    %864 = vmatpush2.bf16.msra.mxu0 %v620
    %865 = vmatprep.subr.bf16.mxu0 %v619
    %866 = vmatpush2.bf16.msra.mxu0 %v618
    %867 = vmatprep.mubr.bf16.mxu0 %v223
    %868 = vmatmul.mubr.bf16.gmra.mxu0 %v222
    %v869 = vpop.f32.mrf.mxu0
    %v870 = vadd.f32 %v829, %v869
    %v871 = vpop.f32.mrf.mxu0
    %v872 = vadd.f32 %v831, %v871
    %v873 = vpop.f32.mrf.mxu0
    %v874 = vpop.f32.mrf.mxu0
    %875 = vdwg.mxu0
    %876 = vmatprep.subr.bf16.mxu0 %v649
    %877 = vmatpush1.bf16.msra.mxu0 %v648
    %878 = vmatprep.subr.bf16.mxu0 %v647
    %879 = vmatpush1.bf16.msra.mxu0 %v646
    %880 = vmatprep.subr.bf16.mxu0 %v645
    %881 = vmatpush1.bf16.msra.mxu0 %v644
    %882 = vmatprep.subr.bf16.mxu0 %v643
    %883 = vmatpush1.bf16.msra.mxu0 %v642
    %884 = vmatprep.subr.bf16.mxu0 %v641
    %885 = vmatpush1.bf16.msra.mxu0 %v640
    %886 = vmatprep.subr.bf16.mxu0 %v639
    %887 = vmatpush1.bf16.msra.mxu0 %v638
    %888 = vmatprep.subr.bf16.mxu0 %v637
    %889 = vmatpush1.bf16.msra.mxu0 %v636
    %890 = vmatprep.subr.bf16.mxu0 %v635
    %891 = vmatpush1.bf16.msra.mxu0 %v634
    %892 = vmatprep.subr.bf16.mxu0 %v665
    %893 = vmatpush2.bf16.msra.mxu0 %v664
    %894 = vmatprep.subr.bf16.mxu0 %v663
    %895 = vmatpush2.bf16.msra.mxu0 %v662
    %896 = vmatprep.subr.bf16.mxu0 %v661
    %897 = vmatpush2.bf16.msra.mxu0 %v660
    %898 = vmatprep.subr.bf16.mxu0 %v659
    %899 = vmatpush2.bf16.msra.mxu0 %v658
    %900 = vmatprep.subr.bf16.mxu0 %v657
    %901 = vmatpush2.bf16.msra.mxu0 %v656
    %902 = vmatprep.subr.bf16.mxu0 %v655
    %903 = vmatpush2.bf16.msra.mxu0 %v654
    %904 = vmatprep.subr.bf16.mxu0 %v653
    %905 = vmatpush2.bf16.msra.mxu0 %v652
    %906 = vmatprep.subr.bf16.mxu0 %v651
    %907 = vmatpush2.bf16.msra.mxu0 %v650
    %908 = vmatprep.mubr.bf16.mxu0 %v225
    %909 = vmatmul.mubr.bf16.gmra.mxu0 %v224
    %v910 = vpop.f32.mrf.mxu0
    %v911 = vadd.f32 %v870, %v910
    %v912 = vpop.f32.mrf.mxu0
    %v913 = vadd.f32 %v872, %v912
    %v914 = vpop.f32.mrf.mxu0
    %v915 = vpop.f32.mrf.mxu0
    %916 = vdwg.mxu0
    %917 = vmatprep.subr.bf16.mxu0 %v681
    %918 = vmatpush1.bf16.msra.mxu0 %v680
    %919 = vmatprep.subr.bf16.mxu0 %v679
    %920 = vmatpush1.bf16.msra.mxu0 %v678
    %921 = vmatprep.subr.bf16.mxu0 %v677
    %922 = vmatpush1.bf16.msra.mxu0 %v676
    %923 = vmatprep.subr.bf16.mxu0 %v675
    %924 = vmatpush1.bf16.msra.mxu0 %v674
    %925 = vmatprep.subr.bf16.mxu0 %v673
    %926 = vmatpush1.bf16.msra.mxu0 %v672
    %927 = vmatprep.subr.bf16.mxu0 %v671
    %928 = vmatpush1.bf16.msra.mxu0 %v670
    %929 = vmatprep.subr.bf16.mxu0 %v669
    %930 = vmatpush1.bf16.msra.mxu0 %v668
    %931 = vmatprep.subr.bf16.mxu0 %v667
    %932 = vmatpush1.bf16.msra.mxu0 %v666
    %933 = vmatprep.subr.bf16.mxu0 0
    %934 = vmatpush2.bf16.msra.mxu0 0
    %935 = vmatprep.subr.bf16.mxu0 0
    %936 = vmatpush2.bf16.msra.mxu0 0
    %937 = vmatprep.subr.bf16.mxu0 0
    %938 = vmatpush2.bf16.msra.mxu0 0
    %939 = vmatprep.subr.bf16.mxu0 0
    %940 = vmatpush2.bf16.msra.mxu0 0
    %941 = vmatprep.subr.bf16.mxu0 0
    %942 = vmatpush2.bf16.msra.mxu0 0
    %943 = vmatprep.subr.bf16.mxu0 0
    %944 = vmatpush2.bf16.msra.mxu0 0
    %945 = vmatprep.subr.bf16.mxu0 0
    %946 = vmatpush2.bf16.msra.mxu0 0
    %947 = vmatprep.subr.bf16.mxu0 0
    %948 = vmatpush2.bf16.msra.mxu0 0
    %949 = vmatprep.mubr.bf16.mxu0 0
    %950 = vmatmul.mubr.bf16.gmra.mxu0 %v226
    %v951 = vpop.f32.mrf.mxu0
    %v952 = vadd.f32 %v911, %v951
    %v953 = vpop.f32.mrf.mxu0
    %v954 = vadd.f32 %v913, %v953
    %v955 = vpop.f32.mrf.mxu0
    %v956 = vpop.f32.mrf.mxu0
    %957 = vdwg.mxu0
    %v958 = vmax.f32 %v952, 0.0
    %v959 = vmax.f32 %v954, 0.0
    %v960 = vpack.c.bf16 %v958, %v958
    %v961 = vpack.c.bf16 %v959, %v959
    %v962 = vld [vmem:[#allocation7] sm:$0xf]
    %v963 = vld [vmem:[#allocation7 + $0x4] sm:$0xf]
    %v964 = vld [vmem:[#allocation7 + $0x8] sm:$0xf]
    %v965 = vld [vmem:[#allocation7 + $0xc] sm:$0xf]
    %v966 = vld [vmem:[#allocation7 + $0x10] sm:$0xf]
    %v967 = vld [vmem:[#allocation7 + $0x14] sm:$0xf]
    %v968 = vld [vmem:[#allocation7 + $0x18] sm:$0xf]
    %v969 = vld [vmem:[#allocation7 + $0x1c] sm:$0xf]
    %v970 = vld [vmem:[#allocation7 + $0x20] sm:$0xf]
    %v971 = vld [vmem:[#allocation7 + $0x24] sm:$0xf]
    %v972 = vld [vmem:[#allocation7 + $0x28] sm:$0xf]
    %v973 = vld [vmem:[#allocation7 + $0x2c] sm:$0xf]
    %v974 = vld [vmem:[#allocation7 + $0x30] sm:$0xf]
    %v975 = vld [vmem:[#allocation7 + $0x34] sm:$0xf]
    %v976 = vld [vmem:[#allocation7 + $0x38] sm:$0xf]
    %v977 = vld [vmem:[#allocation7 + $0x3c] sm:$0xf]
    %v978 = vld [vmem:[#allocation7 + $0x40] sm:$0xf]
    %v979 = vld [vmem:[#allocation7 + $0x44] sm:$0xf]
    %v980 = vld [vmem:[#allocation7 + $0x48] sm:$0xf]
    %v981 = vld [vmem:[#allocation7 + $0x4c] sm:$0xf]
    %v982 = vld [vmem:[#allocation7 + $0x50] sm:$0xf]
    %v983 = vld [vmem:[#allocation7 + $0x54] sm:$0xf]
    %v984 = vld [vmem:[#allocation7 + $0x58] sm:$0xf]
    %v985 = vld [vmem:[#allocation7 + $0x5c] sm:$0xf]
    %v986 = vld [vmem:[#allocation7 + $0x60] sm:$0xf]
    %v987 = vld [vmem:[#allocation7 + $0x64] sm:$0xf]
    %v988 = vld [vmem:[#allocation7 + $0x68] sm:$0xf]
    %v989 = vld [vmem:[#allocation7 + $0x6c] sm:$0xf]
    %v990 = vld [vmem:[#allocation7 + $0x70] sm:$0xf]
    %v991 = vld [vmem:[#allocation7 + $0x74] sm:$0xf]
    %v992 = vld [vmem:[#allocation7 + $0x78] sm:$0xf]
    %v993 = vld [vmem:[#allocation7 + $0x7c] sm:$0xf]
    %v994 = vld [vmem:[%s4] sm:$0x1]
    %v996 = vlaneseq
    %v997 = vshrl.u32 %v996, 7
    %v998 = vsub.s32 0, %v997
    %v999 = vrot.slane %v994, %v998
    %v1033 = vunpack.c.l.b16 %v962
    %v1034 = vunpack.c.l.b16 %v963
    %v1035 = vunpack.c.l.b16 %v964
    %v1036 = vunpack.c.l.b16 %v965
    %v1037 = vunpack.c.l.b16 %v966
    %v1038 = vunpack.c.l.b16 %v967
    %v1039 = vunpack.c.l.b16 %v968
    %v1040 = vunpack.c.l.b16 %v969
    %v1041 = vunpack.c.l.b16 %v970
    %v1042 = vunpack.c.l.b16 %v971
    %v1043 = vunpack.c.l.b16 %v972
    %v1044 = vunpack.c.l.b16 %v973
    %v1045 = vunpack.c.l.b16 %v974
    %v1046 = vunpack.c.l.b16 %v975
    %v1047 = vunpack.c.l.b16 %v976
    %v1048 = vunpack.c.l.b16 %v977
    %v1049 = vunpack.c.l.b16 %v978
    %v1050 = vunpack.c.l.b16 %v979
    %v1051 = vunpack.c.l.b16 %v980
    %v1052 = vunpack.c.l.b16 %v981
    %v1053 = vunpack.c.l.b16 %v982
    %v1054 = vunpack.c.l.b16 %v983
    %v1055 = vunpack.c.l.b16 %v984
    %v1056 = vunpack.c.l.b16 %v985
    %v1057 = vunpack.c.l.b16 %v986
    %v1058 = vunpack.c.l.b16 %v987
    %v1059 = vunpack.c.l.b16 %v988
    %v1060 = vunpack.c.l.b16 %v989
    %v1061 = vunpack.c.l.b16 %v990
    %v1062 = vunpack.c.l.b16 %v991
    %v1063 = vunpack.c.l.b16 %v992
    %v1064 = vunpack.c.l.b16 %v993
    %v1065 = vpack.c.b16 %v1034, %v1033
    %v1066 = vpack.c.b16 %v1036, %v1035
    %v1067 = vpack.c.b16 %v1038, %v1037
    %v1068 = vpack.c.b16 %v1040, %v1039
    %v1069 = vpack.c.b16 %v1042, %v1041
    %v1070 = vpack.c.b16 %v1044, %v1043
    %v1071 = vpack.c.b16 %v1046, %v1045
    %v1072 = vpack.c.b16 %v1048, %v1047
    %v1073 = vpack.c.b16 %v1050, %v1049
    %v1074 = vpack.c.b16 %v1052, %v1051
    %v1075 = vpack.c.b16 %v1054, %v1053
    %v1076 = vpack.c.b16 %v1056, %v1055
    %v1077 = vpack.c.b16 %v1058, %v1057
    %v1078 = vpack.c.b16 %v1060, %v1059
    %v1079 = vpack.c.b16 %v1062, %v1061
    %v1080 = vpack.c.b16 %v1064, %v1063
    %1097 = vmatprep.subr.bf16.mxu0 0
    %1098 = vmatpush1.bf16.msra.mxu0 %v1072
    %1099 = vmatprep.subr.bf16.mxu0 0
    %1100 = vmatpush1.bf16.msra.mxu0 %v1071
    %1101 = vmatprep.subr.bf16.mxu0 0
    %1102 = vmatpush1.bf16.msra.mxu0 %v1070
    %1103 = vmatprep.subr.bf16.mxu0 0
    %1104 = vmatpush1.bf16.msra.mxu0 %v1069
    %1105 = vmatprep.subr.bf16.mxu0 0
    %1106 = vmatpush1.bf16.msra.mxu0 %v1068
    %1107 = vmatprep.subr.bf16.mxu0 0
    %1108 = vmatpush1.bf16.msra.mxu0 %v1067
    %1109 = vmatprep.subr.bf16.mxu0 0
    %1110 = vmatpush1.bf16.msra.mxu0 %v1066
    %1111 = vmatprep.subr.bf16.mxu0 0
    %1112 = vmatpush1.bf16.msra.mxu0 %v1065
    %1113 = vmatprep.subr.bf16.mxu0 0
    %1114 = vmatpush2.bf16.msra.mxu0 %v1080
    %1115 = vmatprep.subr.bf16.mxu0 0
    %1116 = vmatpush2.bf16.msra.mxu0 %v1079
    %1117 = vmatprep.subr.bf16.mxu0 0
    %1118 = vmatpush2.bf16.msra.mxu0 %v1078
    %1119 = vmatprep.subr.bf16.mxu0 0
    %1120 = vmatpush2.bf16.msra.mxu0 %v1077
    %1121 = vmatprep.subr.bf16.mxu0 0
    %1122 = vmatpush2.bf16.msra.mxu0 %v1076
    %1123 = vmatprep.subr.bf16.mxu0 0
    %1124 = vmatpush2.bf16.msra.mxu0 %v1075
    %1125 = vmatprep.subr.bf16.mxu0 0
    %1126 = vmatpush2.bf16.msra.mxu0 %v1074
    %1127 = vmatprep.subr.bf16.mxu0 0
    %1128 = vmatpush2.bf16.msra.mxu0 %v1073
    %1129 = vmatprep.mubr.bf16.mxu0 %v961
    %1130 = vmatmul.mubr.bf16.gmra.mxu0 %v960
    %v1131 = vpop.f32.mrf.mxu0
    %v1132 = vadd.f32 %v999, %v1131
    %v1133 = vpop.f32.mrf.mxu0
    %v1134 = vpop.f32.mrf.mxu0
    %v1135 = vpop.f32.mrf.mxu0
    %1136 = vdwg.mxu0
    %v1137 = vmax.f32 %v1132, 0.0
    %v1138 = vpack.c.bf16 %v1137, %v1137
    %v1139 = vld [vmem:[#allocation8] sm:$0xf]
    %v1140 = vld [vmem:[#allocation8 + $0x4] sm:$0xf]
    %v1141 = vld [vmem:[#allocation8 + $0x8] sm:$0xf]
    %v1142 = vld [vmem:[#allocation8 + $0xc] sm:$0xf]
    %v1143 = vld [vmem:[#allocation8 + $0x10] sm:$0xf]
    %v1144 = vld [vmem:[#allocation8 + $0x14] sm:$0xf]
    %v1145 = vld [vmem:[#allocation8 + $0x18] sm:$0xf]
    %v1146 = vld [vmem:[#allocation8 + $0x1c] sm:$0xf]
    %v1147 = vld [vmem:[#allocation8 + $0x20] sm:$0xf]
    %v1148 = vld [vmem:[#allocation8 + $0x24] sm:$0xf]
    %v1149 = vld [vmem:[#allocation8 + $0x28] sm:$0xf]
    %v1150 = vld [vmem:[#allocation8 + $0x2c] sm:$0xf]
    %v1151 = vld [vmem:[#allocation8 + $0x30] sm:$0xf]
    %v1152 = vld [vmem:[#allocation8 + $0x34] sm:$0xf]
    %v1153 = vld [vmem:[#allocation8 + $0x38] sm:$0xf]
    %v1154 = vld [vmem:[#allocation8 + $0x3c] sm:$0xf]
    %v1155 = vld [vmem:[%s6] sm:$0x1]
    %v1157 = vlaneseq
    %v1158 = vshrl.u32 %v1157, 7
    %v1159 = vsub.s32 0, %v1158
    %v1160 = vrot.slane %v1155, %v1159
    %v1178 = vunpack.c.l.b16 %v1139
    %v1179 = vunpack.c.l.b16 %v1140
    %v1180 = vunpack.c.l.b16 %v1141
    %v1181 = vunpack.c.l.b16 %v1142
    %v1182 = vunpack.c.l.b16 %v1143
    %v1183 = vunpack.c.l.b16 %v1144
    %v1184 = vunpack.c.l.b16 %v1145
    %v1185 = vunpack.c.l.b16 %v1146
    %v1186 = vunpack.c.l.b16 %v1147
    %v1187 = vunpack.c.l.b16 %v1148
    %v1188 = vunpack.c.l.b16 %v1149
    %v1189 = vunpack.c.l.b16 %v1150
    %v1190 = vunpack.c.l.b16 %v1151
    %v1191 = vunpack.c.l.b16 %v1152
    %v1192 = vunpack.c.l.b16 %v1153
    %v1193 = vunpack.c.l.b16 %v1154
    %v1194 = vpack.c.b16 %v1179, %v1178
    %v1195 = vpack.c.b16 %v1181, %v1180
    %v1196 = vpack.c.b16 %v1183, %v1182
    %v1197 = vpack.c.b16 %v1185, %v1184
    %v1198 = vpack.c.b16 %v1187, %v1186
    %v1199 = vpack.c.b16 %v1189, %v1188
    %v1200 = vpack.c.b16 %v1191, %v1190
    %v1201 = vpack.c.b16 %v1193, %v1192
    %1210 = vmatprep.subr.bf16.mxu0 0
    %1211 = vmatpush1.bf16.msra.mxu0 %v1201
    %1212 = vmatprep.subr.bf16.mxu0 0
    %1213 = vmatpush1.bf16.msra.mxu0 %v1200
    %1214 = vmatprep.subr.bf16.mxu0 0
    %1215 = vmatpush1.bf16.msra.mxu0 %v1199
    %1216 = vmatprep.subr.bf16.mxu0 0
    %1217 = vmatpush1.bf16.msra.mxu0 %v1198
    %1218 = vmatprep.subr.bf16.mxu0 0
    %1219 = vmatpush1.bf16.msra.mxu0 %v1197
    %1220 = vmatprep.subr.bf16.mxu0 0
    %1221 = vmatpush1.bf16.msra.mxu0 %v1196
    %1222 = vmatprep.subr.bf16.mxu0 0
    %1223 = vmatpush1.bf16.msra.mxu0 %v1195
    %1224 = vmatprep.subr.bf16.mxu0 0
    %1225 = vmatpush1.bf16.msra.mxu0 %v1194
    %1226 = vmatprep.subr.bf16.mxu0 0
    %1227 = vmatpush2.bf16.msra.mxu0 0
    %1228 = vmatprep.subr.bf16.mxu0 0
    %1229 = vmatpush2.bf16.msra.mxu0 0
    %1230 = vmatprep.subr.bf16.mxu0 0
    %1231 = vmatpush2.bf16.msra.mxu0 0
    %1232 = vmatprep.subr.bf16.mxu0 0
    %1233 = vmatpush2.bf16.msra.mxu0 0
    %1234 = vmatprep.subr.bf16.mxu0 0
    %1235 = vmatpush2.bf16.msra.mxu0 0
    %1236 = vmatprep.subr.bf16.mxu0 0
    %1237 = vmatpush2.bf16.msra.mxu0 0
    %1238 = vmatprep.subr.bf16.mxu0 0
    %1239 = vmatpush2.bf16.msra.mxu0 0
    %1240 = vmatprep.subr.bf16.mxu0 0
    %1241 = vmatpush2.bf16.msra.mxu0 0
    %1242 = vmatprep.mubr.bf16.mxu0 0
    %1243 = vmatmul.mubr.bf16.gmra.mxu0 %v1138
    %v1244 = vpop.f32.mrf.mxu0
    %v1245 = vadd.f32 %v1160, %v1244
    %v1246 = vpop.f32.mrf.mxu0
    %v1247 = vpop.f32.mrf.mxu0
    %v1248 = vpop.f32.mrf.mxu0
    %1249 = vdwg.mxu0
    %1250 = vst [vmem:[#allocation10] sm:$0xff] %v1245
    // Predicated region
    $region46: #{tpu_custom_call.1} parent=1 // pred_check
      _
    $region47: #{tpu_custom_call.1} parent=1 // pred_check_branch
      %1252 = sbr.rel (0) target = $region49
    $region48: #{tpu_custom_call.1} parent=1 // pred_region
      %s1254 = ssub.s32 128, 128
      %1255 = vsyncadd [#allocation4], %s1254
      %s1257 = sshll.u32 [#allocation10], 4
      %s1258 = int_to_ptr.vmem [resolvable:$true] %s1257
      %1260 = dma.vmem_to_hbm [thread:$0]  %s1258, 128, %s7, [#allocation4]
    $region49: #{tpu_custom_call.1} parent=1 // pred_fallthru
      _
    // Predicated region
    $region50: #{tpu_custom_call.1} parent=1 // pred_check
      _
    $region51: #{tpu_custom_call.1} parent=1 // pred_check_branch
      %1262 = sbr.rel (0) target = $region53
    $region52: #{tpu_custom_call.1} parent=1 // pred_region
      %1263 = dma.done [#allocation4], 128
    $region53: #{tpu_custom_call.1} parent=1 // pred_fallthru
      _
    %1264 = vsyncpa [#allocation3], 1
    %1265 = vsyncpa [#allocation6], 1
    %1266 = vsyncpa [#allocation9], 1
    %1267 = vsyncpa [#allocation4], 1

</llo_original>
